<compile_context>
chip_gen: v7x
topology: tpu7x:2x2x1
jax: 0.10.0
libtpu: 0.0.40
codegen_flags: <defaults>
</compile_context>

<pallas_src>
import jax
import jax.numpy as jnp
from jax.experimental import pallas as pl
from jax.experimental.pallas import tpu as pltpu

EPS = 1e-5   # PyTorch BatchNorm1d default eps


def _round_up(n, m):
    return ((n + m - 1) // m) * m


# ----------------------------------------------------------------------------
# Kernel: fused 4-matmul MLP on one batch tile.  bf16 MXU inputs, f32 math.
# ----------------------------------------------------------------------------
def _actor_kernel(x_ref,
                  w1_ref, b1_ref,
                  w2_ref, b2_ref,
                  w3_ref, b3_ref,
                  wo_ref, bo_ref,
                  o_ref):
    x = x_ref[...]                                                   # bf16 (TB, S)

    # Linear(S, 128) + LeakyReLU(0.2)     (BN1 folded into W2'/b2')
    h = jnp.dot(x, w1_ref[...], preferred_element_type=jnp.float32) + b1_ref[...]
    h = jnp.where(h >= 0.0, h, 0.2 * h)                              # f32 VPU

    # Linear(128, 128) + Tanh             (Dropout(0.3) = identity in eval mode)
    h = jnp.dot(h.astype(jnp.bfloat16), w2_ref[...],
                preferred_element_type=jnp.float32) + b2_ref[...]
    h = jnp.tanh(h)                                                  # f32 EUP

    # Linear(128, 64) + Tanh              (BN2 folded into Wo'/bo'); stays 64-lane
    h = jnp.dot(h.astype(jnp.bfloat16), w3_ref[...],
                preferred_element_type=jnp.float32) + b3_ref[...]
    h = jnp.tanh(h)

    # out_layer: Linear(64, A) + Sigmoid  (narrow A-lane masked store)
    logits = jnp.dot(h.astype(jnp.bfloat16), wo_ref[...],
                     preferred_element_type=jnp.float32) + bo_ref[...]
    o_ref[...] = jax.nn.sigmoid(logits)


# ----------------------------------------------------------------------------
# One-time parameter preparation (call at model-load time, not per forward).
# ----------------------------------------------------------------------------
def prepare_params(params):
    """Fold eval-mode BatchNorms into the adjacent Linears (in f32) and cast
    the matmul weights to bf16.  Biases stay f32 (added post-accumulation)."""
    f32, bf16 = jnp.float32, jnp.bfloat16

    # BN1 (after LeakyReLU) folds into Linear(128, 128).
    s1 = params["g1"] * jax.lax.rsqrt(params["v1"] + EPS)            # (1, 128)
    w2 = params["w2"] * s1.reshape(-1, 1)
    b2 = params["b2"] + (params["be1"] - params["m1"] * s1) @ params["w2"]

    # BN2 (after second Tanh) folds into out_layer Linear(64, A).
    s2 = params["g2"] * jax.lax.rsqrt(params["v2"] + EPS)            # (1, 64)
    wo = params["wo"] * s2.reshape(-1, 1)
    bo = params["bo"] + (params["be2"] - params["m2"] * s2) @ params["wo"]

    return dict(
        w1=params["w1"].astype(bf16), b1=params["b1"].astype(f32),
        w2=w2.astype(bf16),           b2=b2.astype(f32),
        w3=params["w3"].astype(bf16), b3=params["b3"].astype(f32),
        wo=wo.astype(bf16),           bo=bo.astype(f32),
    )


def _choose_batch_tile(B, batch_tile, min_steps=8):
    """Pick a batch tile: multiple of 8 (sublane rule), capped by batch_tile,
    and shrunk for large B so the 'parallel' grid has >= min_steps steps
    (v7x megacore sharding + DMA pipelining)."""
    TB = max(8, (min(batch_tile, _round_up(B, 8)) // 8) * 8)
    if B >= min_steps * 128 and (B + TB - 1) // TB < min_steps:
        TB = max(128, _round_up((B + min_steps - 1) // min_steps, 8))
    return TB


# ----------------------------------------------------------------------------
# Forward: weights VMEM-resident, x/out batch-tiled over a 1-D parallel grid.
# ----------------------------------------------------------------------------
def atlas_knob_actor_forward(x, fp, *, batch_tile=2048):
    """x: (B, state_num) float32.  fp: dict from prepare_params()."""
    B, S = x.shape
    H1 = fp["w1"].shape[1]          # 128
    H2 = fp["w3"].shape[1]          # 64
    A = fp["wo"].shape[1]           # action_num

    TB = _choose_batch_tile(B, batch_tile)
    grid = (pl.cdiv(B, TB),)        # ragged trailing block handled by Pallas

    xb = x.astype(jnp.bfloat16)     # half the input DMA bytes

    def resident(shape):
        # Constant block index -> fetched once, stays VMEM-resident.
        return pl.BlockSpec(shape, lambda i: (0, 0))

    in_specs = [
        pl.BlockSpec((TB, S), lambda i: (i, 0)),     # x tile, pipelined over grid
        resident((S, H1)),  resident((1, H1)),       # W1,  b1
        resident((H1, H1)), resident((1, H1)),       # W2', b2'
        resident((H1, H2)), resident((1, H2)),       # W3,  b3
        resident((H2, A)),  resident((1, A)),        # Wo', bo'
    ]
    out_spec = pl.BlockSpec((TB, A), lambda i: (i, 0))

    # Advisory cost estimate for XLA's scheduler.
    flops = 2 * B * (S * H1 + H1 * H1 + H1 * H2 + H2 * A)
    transcendentals = B * (H1 + H2 + A)              # tanh + tanh + sigmoid
    param_bytes = 2 * (S * H1 + H1 * H1 + H1 * H2 + H2 * A) + 4 * (3 * H1 + H2 + A)
    bytes_accessed = 2 * B * S + 4 * B * A + param_bytes

    return pl.pallas_call(
        _actor_kernel,
        out_shape=jax.ShapeDtypeStruct((B, A), jnp.float32),
        grid=grid,
        in_specs=in_specs,
        out_specs=out_spec,
        compiler_params=pltpu.CompilerParams(
            dimension_semantics=("parallel",),
        ),
        cost_estimate=pl.CostEstimate(
            flops=flops,
            transcendentals=transcendentals,
            bytes_accessed=bytes_accessed,
        ),
    )(xb, fp["w1"], fp["b1"], fp["w2"], fp["b2"],
      fp["w3"], fp["b3"], fp["wo"], fp["bo"])


# ----------------------------------------------------------------------------
# Synthetic parameters + pure-JAX reference (unfolded, f32, eval mode).
# ----------------------------------------------------------------------------
def make_params(key, state_num, action_num):
    """Deterministic synthetic parameters (mirrors _init_weights intent)."""
    ks = jax.random.split(key, 12)

    def lin(kw, kb, d_in, d_out):
        # PyTorch weight is (out, in); store transposed as (in, out).
        w = (0.01 * jax.random.normal(kw, (d_out, d_in), jnp.float32)).T
        b = jax.random.uniform(kb, (1, d_out), jnp.float32, -0.1, 0.1)
        return w, b

    w1, b1 = lin(ks[0], ks[1], state_num, 128)
    w2, b2 = lin(ks[2], ks[3], 128, 128)
    w3, b3 = lin(ks[4], ks[5], 128, 64)
    wo, bo = lin(ks[6], ks[7], 64, action_num)

    # BatchNorm affine params + running stats (nontrivial but deterministic).
    g1 = 1.0 + 0.05 * jax.random.normal(ks[8], (1, 128), jnp.float32)
    be1 = 0.05 * jax.random.normal(ks[9], (1, 128), jnp.float32)
    m1 = 0.01 * jax.random.normal(ks[10], (1, 128), jnp.float32)
    v1 = jnp.ones((1, 128), jnp.float32)

    g2 = 1.0 + 0.05 * jax.random.normal(ks[11], (1, 64), jnp.float32)
    be2 = jnp.zeros((1, 64), jnp.float32)
    m2 = jnp.zeros((1, 64), jnp.float32)
    v2 = jnp.ones((1, 64), jnp.float32)

    return dict(w1=w1, b1=b1, g1=g1, be1=be1, m1=m1, v1=v1,
                w2=w2, b2=b2,
                w3=w3, b3=b3, g2=g2, be2=be2, m2=m2, v2=v2,
                wo=wo, bo=bo)


def reference_forward(x, p):
    """Pure-JAX f32 reference of the PyTorch module (eval mode, unfolded BN)."""
    h = x @ p["w1"] + p["b1"]
    h = jnp.where(h >= 0, h, 0.2 * h)
    h = (h - p["m1"]) / jnp.sqrt(p["v1"] + EPS) * p["g1"] + p["be1"]
    h = jnp.tanh(h @ p["w2"] + p["b2"])
    h = jnp.tanh(h @ p["w3"] + p["b3"])
    h = (h - p["m2"]) / jnp.sqrt(p["v2"] + EPS) * p["g2"] + p["be2"]
    return jax.nn.sigmoid(h @ p["wo"] + p["bo"])


if __name__ == "__main__":
    state_num = 32
    action_num = 8
    batch = 8

    key = jax.random.PRNGKey(0)
    kx, kp = jax.random.split(key)
    x = jax.random.normal(kx, (batch, state_num), jnp.float32)
    params = make_params(kp, state_num, action_num)

    folded = prepare_params(params)            # one-time, at "model load"
    out = jax.block_until_ready(atlas_knob_actor_forward(x, folded))

    ref = reference_forward(x, params)
    assert out.shape == (batch, action_num)
    assert out.dtype == jnp.float32
    # bf16 MXU operands -> loosened tolerance vs f32 reference (post-sigmoid).
    assert jnp.allclose(out, ref, atol=2e-3, rtol=2e-3), "mismatch vs reference"

    print("KERNEL_OK")
</pallas_src>

<mosaic_0001>
module attributes {stable_mosaic.version = 11 : i64} {
  func.func @_actor_kernel(%arg0: i32, %arg1: memref<8x32xbf16, #tpu.memory_space<vmem>>, %arg2: memref<32x128xbf16, #tpu.memory_space<vmem>>, %arg3: memref<1x128xf32, #tpu.memory_space<vmem>>, %arg4: memref<128x128xbf16, #tpu.memory_space<vmem>>, %arg5: memref<1x128xf32, #tpu.memory_space<vmem>>, %arg6: memref<128x64xbf16, #tpu.memory_space<vmem>>, %arg7: memref<1x64xf32, #tpu.memory_space<vmem>>, %arg8: memref<64x8xbf16, #tpu.memory_space<vmem>>, %arg9: memref<1x8xf32, #tpu.memory_space<vmem>>, %arg10: memref<8x8xf32, #tpu.memory_space<vmem>>) attributes {dimension_semantics = [#tpu.dimension_semantics<parallel>], iteration_bounds = array<i64: 1>, scalar_prefetch = 0 : i64, scratch_operands = 0 : i64, tpu.core_type = #tpu.core_type<tc>, window_params = [{transform_indices = @transform_0, window_bounds = array<i64: 8, 32>}, {pipeline_mode = #tpu.pipeline_mode<synchronous>, transform_indices = @transform_1, window_bounds = array<i64: 32, 128>}, {pipeline_mode = #tpu.pipeline_mode<synchronous>, transform_indices = @transform_2, window_bounds = array<i64: 1, 128>}, {pipeline_mode = #tpu.pipeline_mode<synchronous>, transform_indices = @transform_3, window_bounds = array<i64: 128, 128>}, {pipeline_mode = #tpu.pipeline_mode<synchronous>, transform_indices = @transform_4, window_bounds = array<i64: 1, 128>}, {pipeline_mode = #tpu.pipeline_mode<synchronous>, transform_indices = @transform_5, window_bounds = array<i64: 128, 64>}, {pipeline_mode = #tpu.pipeline_mode<synchronous>, transform_indices = @transform_6, window_bounds = array<i64: 1, 64>}, {pipeline_mode = #tpu.pipeline_mode<synchronous>, transform_indices = @transform_7, window_bounds = array<i64: 64, 8>}, {pipeline_mode = #tpu.pipeline_mode<synchronous>, transform_indices = @transform_8, window_bounds = array<i64: 1, 8>}, {transform_indices = @transform_9, window_bounds = array<i64: 8, 8>}]} {
    %c0 = arith.constant 0 : index
    %c0_0 = arith.constant 0 : index
    %0 = vector.load %arg1[%c0, %c0_0] : memref<8x32xbf16, #tpu.memory_space<vmem>>, vector<8x32xbf16>
    %c0_1 = arith.constant 0 : index
    %c0_2 = arith.constant 0 : index
    %1 = vector.load %arg2[%c0_1, %c0_2] : memref<32x128xbf16, #tpu.memory_space<vmem>>, vector<32x128xbf16>
    %cst = arith.constant dense<0.000000e+00> : vector<8x128xf32>
    %2 = tpu.matmul %0, %1, %cst {dimension_numbers = #tpu.dot_dimension_numbers<[1], [0], [0], [1], [0, 0, 1, 1], [], []>} : vector<8x32xbf16>, vector<32x128xbf16>, vector<8x128xf32> -> vector<8x128xf32>
    %c0_3 = arith.constant 0 : index
    %c0_4 = arith.constant 0 : index
    %3 = vector.load %arg3[%c0_3, %c0_4] : memref<1x128xf32, #tpu.memory_space<vmem>>, vector<1x128xf32>
    %4 = vector.broadcast %3 : vector<1x128xf32> to vector<8x128xf32>
    %5 = arith.addf %2, %4 : vector<8x128xf32>
    %cst_5 = arith.constant 0.000000e+00 : f32
    %6 = vector.broadcast %cst_5 : f32 to vector<8x128xf32>
    %7 = arith.cmpf oge, %5, %6 : vector<8x128xf32>
    %cst_6 = arith.constant 2.000000e-01 : f32
    %8 = vector.broadcast %cst_6 : f32 to vector<8x128xf32>
    %9 = arith.mulf %8, %5 : vector<8x128xf32>
    %10 = arith.select %7, %5, %9 : vector<8x128xi1>, vector<8x128xf32>
    %11 = arith.truncf %10 : vector<8x128xf32> to vector<8x128xbf16>
    %c0_7 = arith.constant 0 : index
    %c0_8 = arith.constant 0 : index
    %12 = vector.load %arg4[%c0_7, %c0_8] : memref<128x128xbf16, #tpu.memory_space<vmem>>, vector<128x128xbf16>
    %cst_9 = arith.constant dense<0.000000e+00> : vector<8x128xf32>
    %13 = tpu.matmul %11, %12, %cst_9 {dimension_numbers = #tpu.dot_dimension_numbers<[1], [0], [0], [1], [0, 0, 1, 1], [], []>} : vector<8x128xbf16>, vector<128x128xbf16>, vector<8x128xf32> -> vector<8x128xf32>
    %c0_10 = arith.constant 0 : index
    %c0_11 = arith.constant 0 : index
    %14 = vector.load %arg5[%c0_10, %c0_11] : memref<1x128xf32, #tpu.memory_space<vmem>>, vector<1x128xf32>
    %15 = vector.broadcast %14 : vector<1x128xf32> to vector<8x128xf32>
    %16 = arith.addf %13, %15 : vector<8x128xf32>
    %17 = math.tanh %16 : vector<8x128xf32>
    %18 = arith.truncf %17 : vector<8x128xf32> to vector<8x128xbf16>
    %c0_12 = arith.constant 0 : index
    %c0_13 = arith.constant 0 : index
    %19 = vector.load %arg6[%c0_12, %c0_13] : memref<128x64xbf16, #tpu.memory_space<vmem>>, vector<128x64xbf16>
    %cst_14 = arith.constant dense<0.000000e+00> : vector<8x64xf32>
    %20 = tpu.matmul %18, %19, %cst_14 {dimension_numbers = #tpu.dot_dimension_numbers<[1], [0], [0], [1], [0, 0, 1, 1], [], []>} : vector<8x128xbf16>, vector<128x64xbf16>, vector<8x64xf32> -> vector<8x64xf32>
    %c0_15 = arith.constant 0 : index
    %c0_16 = arith.constant 0 : index
    %21 = vector.load %arg7[%c0_15, %c0_16] : memref<1x64xf32, #tpu.memory_space<vmem>>, vector<1x64xf32>
    %22 = vector.broadcast %21 : vector<1x64xf32> to vector<8x64xf32>
    %23 = arith.addf %20, %22 : vector<8x64xf32>
    %24 = math.tanh %23 : vector<8x64xf32>
    %25 = arith.truncf %24 : vector<8x64xf32> to vector<8x64xbf16>
    %c0_17 = arith.constant 0 : index
    %c0_18 = arith.constant 0 : index
    %26 = vector.load %arg8[%c0_17, %c0_18] : memref<64x8xbf16, #tpu.memory_space<vmem>>, vector<64x8xbf16>
    %cst_19 = arith.constant dense<0.000000e+00> : vector<8x8xf32>
    %27 = tpu.matmul %25, %26, %cst_19 {dimension_numbers = #tpu.dot_dimension_numbers<[1], [0], [0], [1], [0, 0, 1, 1], [], []>} : vector<8x64xbf16>, vector<64x8xbf16>, vector<8x8xf32> -> vector<8x8xf32>
    %c0_20 = arith.constant 0 : index
    %c0_21 = arith.constant 0 : index
    %28 = vector.load %arg9[%c0_20, %c0_21] : memref<1x8xf32, #tpu.memory_space<vmem>>, vector<1x8xf32>
    %29 = vector.broadcast %28 : vector<1x8xf32> to vector<8x8xf32>
    %30 = arith.addf %27, %29 : vector<8x8xf32>
    %31 = arith.negf %30 : vector<8x8xf32>
    %32 = math.exp %31 : vector<8x8xf32>
    %cst_22 = arith.constant 1.000000e+00 : f32
    %33 = vector.broadcast %cst_22 : f32 to vector<8x8xf32>
    %34 = arith.addf %33, %32 : vector<8x8xf32>
    %35 = arith.divf %33, %34 : vector<8x8xf32>
    %c0_23 = arith.constant 0 : index
    %c0_24 = arith.constant 0 : index
    %36 = vector.load %arg10[%c0_23, %c0_24] : memref<8x8xf32, #tpu.memory_space<vmem>>, vector<8x8xf32>
    tpu.vector_store %arg10[%c0_23, %c0_24], %35 {strides = array<i32>} : memref<8x8xf32, #tpu.memory_space<vmem>>, vector<8x8xf32>,
    return
  }
  func.func @transform_0(%arg0: i32) -> (i32, i32) {
    %c0_i32 = arith.constant 0 : i32
    %c0_i32_0 = arith.constant 0 : i32
    return %arg0, %c0_i32 : i32, i32
  }
  func.func @transform_1(%arg0: i32) -> (i32, i32) {
    %c0_i32 = arith.constant 0 : i32
    %c0_i32_0 = arith.constant 0 : i32
    %c0_i32_1 = arith.constant 0 : i32
    return %c0_i32, %c0_i32_0 : i32, i32
  }
  func.func @transform_2(%arg0: i32) -> (i32, i32) {
    %c0_i32 = arith.constant 0 : i32
    %c0_i32_0 = arith.constant 0 : i32
    %c0_i32_1 = arith.constant 0 : i32
    return %c0_i32, %c0_i32_0 : i32, i32
  }
  func.func @transform_3(%arg0: i32) -> (i32, i32) {
    %c0_i32 = arith.constant 0 : i32
    %c0_i32_0 = arith.constant 0 : i32
    %c0_i32_1 = arith.constant 0 : i32
    return %c0_i32, %c0_i32_0 : i32, i32
  }
  func.func @transform_4(%arg0: i32) -> (i32, i32) {
    %c0_i32 = arith.constant 0 : i32
    %c0_i32_0 = arith.constant 0 : i32
    %c0_i32_1 = arith.constant 0 : i32
    return %c0_i32, %c0_i32_0 : i32, i32
  }
  func.func @transform_5(%arg0: i32) -> (i32, i32) {
    %c0_i32 = arith.constant 0 : i32
    %c0_i32_0 = arith.constant 0 : i32
    %c0_i32_1 = arith.constant 0 : i32
    return %c0_i32, %c0_i32_0 : i32, i32
  }
  func.func @transform_6(%arg0: i32) -> (i32, i32) {
    %c0_i32 = arith.constant 0 : i32
    %c0_i32_0 = arith.constant 0 : i32
    %c0_i32_1 = arith.constant 0 : i32
    return %c0_i32, %c0_i32_0 : i32, i32
  }
  func.func @transform_7(%arg0: i32) -> (i32, i32) {
    %c0_i32 = arith.constant 0 : i32
    %c0_i32_0 = arith.constant 0 : i32
    %c0_i32_1 = arith.constant 0 : i32
    return %c0_i32, %c0_i32_0 : i32, i32
  }
  func.func @transform_8(%arg0: i32) -> (i32, i32) {
    %c0_i32 = arith.constant 0 : i32
    %c0_i32_0 = arith.constant 0 : i32
    %c0_i32_1 = arith.constant 0 : i32
    return %c0_i32, %c0_i32_0 : i32, i32
  }
  func.func @transform_9(%arg0: i32) -> (i32, i32) {
    %c0_i32 = arith.constant 0 : i32
    %c0_i32_0 = arith.constant 0 : i32
    return %arg0, %c0_i32 : i32, i32
  }
}

</mosaic_0001>

<llo_original>
// kernel: tpu_custom_call.1
$region0: #{tpu_custom_call.1}
  #allocation0 [shape = 'u32[]', space=smem, size = 0x4, offset = 0x4, fixed_abs, tag = 'smem constant byte address 0x4 - core index']
  #allocation1 [shape = 'u32[144,128]{1,0:T(1,128)}', space=vmem, size = 0x12000, scoped, tag = 'internal scratch']
  %s0 = inlined_call_operand.vmem [shape: bf16[8,32], index: 0, kind: input, shape index: {}]
  %s1 = inlined_call_operand.vmem [shape: bf16[32,128], index: 1, kind: input, shape index: {}]
  %s2 = inlined_call_operand.vmem [shape: f32[1,128], index: 2, kind: input, shape index: {}]
  %s3 = inlined_call_operand.vmem [shape: bf16[128,128], index: 3, kind: input, shape index: {}]
  %s4 = inlined_call_operand.vmem [shape: f32[1,128], index: 4, kind: input, shape index: {}]
  %s5 = inlined_call_operand.vmem [shape: bf16[128,64], index: 5, kind: input, shape index: {}]
  %s6 = inlined_call_operand.vmem [shape: f32[1,64], index: 6, kind: input, shape index: {}]
  %s7 = inlined_call_operand.vmem [shape: bf16[64,8], index: 7, kind: input, shape index: {}]
  %s8 = inlined_call_operand.vmem [shape: f32[1,8], index: 8, kind: input, shape index: {}]
  %s9 = inlined_call_operand.hbm [shape: f32[8,8], index: 9, kind: output, shape index: {}]
  %s10 = sld [smem:[#allocation0]]
  $region46: #{tpu_custom_call.1} parent=0
    _
  %s12 = ssub.s32 1, %s10
  %s13 = scalar_select 0, %s12, %s10
  $region1: #{tpu_custom_call.1} parent=0
    #allocation2 [shape = 'u8[4096]{0}', space=vmem, size = 0x1000, scoped, tag = 'output window, operand 0, single buffered']
    #allocation3 [shape = 's32[1]{0}', space=sflag, size = 0x4, scoped, tag = 'scoped memory for tpu_custom_call.1']
    %14 = vsyncpa [#allocation3], 0
    // Predicated region
    $region2: #{tpu_custom_call.1} parent=1 // pred_check
      _
    $region3: #{tpu_custom_call.1} parent=1 // pred_check_branch
      %16 = sbr.rel (0) target = $region5
    $region4: #{tpu_custom_call.1} parent=1 // pred_region
      _
    $region5: #{tpu_custom_call.1} parent=1 // pred_fallthru
      _
    // Predicated region
    $region6: #{tpu_custom_call.1} parent=1 // pred_check
      _
    $region7: #{tpu_custom_call.1} parent=1 // pred_check_branch
      %18 = sbr.rel (0) target = $region9
    $region8: #{tpu_custom_call.1} parent=1 // pred_region
      _
    $region9: #{tpu_custom_call.1} parent=1 // pred_fallthru
      _
    // Predicated region
    $region10: #{tpu_custom_call.1} parent=1 // pred_check
      _
    $region11: #{tpu_custom_call.1} parent=1 // pred_check_branch
      %20 = sbr.rel (0) target = $region13
    $region12: #{tpu_custom_call.1} parent=1 // pred_region
      _
    $region13: #{tpu_custom_call.1} parent=1 // pred_fallthru
      _
    // Predicated region
    $region14: #{tpu_custom_call.1} parent=1 // pred_check
      _
    $region15: #{tpu_custom_call.1} parent=1 // pred_check_branch
      %22 = sbr.rel (0) target = $region17
    $region16: #{tpu_custom_call.1} parent=1 // pred_region
      _
    $region17: #{tpu_custom_call.1} parent=1 // pred_fallthru
      _
    // Predicated region
    $region18: #{tpu_custom_call.1} parent=1 // pred_check
      _
    $region19: #{tpu_custom_call.1} parent=1 // pred_check_branch
      %24 = sbr.rel (0) target = $region21
    $region20: #{tpu_custom_call.1} parent=1 // pred_region
      _
    $region21: #{tpu_custom_call.1} parent=1 // pred_fallthru
      _
    // Predicated region
    $region22: #{tpu_custom_call.1} parent=1 // pred_check
      _
    $region23: #{tpu_custom_call.1} parent=1 // pred_check_branch
      %26 = sbr.rel (0) target = $region25
    $region24: #{tpu_custom_call.1} parent=1 // pred_region
      _
    $region25: #{tpu_custom_call.1} parent=1 // pred_fallthru
      _
    // Predicated region
    $region26: #{tpu_custom_call.1} parent=1 // pred_check
      _
    $region27: #{tpu_custom_call.1} parent=1 // pred_check_branch
      %28 = sbr.rel (0) target = $region29
    $region28: #{tpu_custom_call.1} parent=1 // pred_region
      _
    $region29: #{tpu_custom_call.1} parent=1 // pred_fallthru
      _
    // Predicated region
    $region30: #{tpu_custom_call.1} parent=1 // pred_check
      _
    $region31: #{tpu_custom_call.1} parent=1 // pred_check_branch
      %30 = sbr.rel (0) target = $region33
    $region32: #{tpu_custom_call.1} parent=1 // pred_region
      _
    $region33: #{tpu_custom_call.1} parent=1 // pred_fallthru
      _
    // Predicated region
    $region34: #{tpu_custom_call.1} parent=1 // pred_check
      _
    $region35: #{tpu_custom_call.1} parent=1 // pred_check_branch
      %32 = sbr.rel (0) target = $region37
    $region36: #{tpu_custom_call.1} parent=1 // pred_region
      _
    $region37: #{tpu_custom_call.1} parent=1 // pred_fallthru
      _
    %v34 = vld [vmem:[%s0] sm:$0xf]
    %v35 = vld [vmem:[%s1] sm:$0xf]
    %v36 = vld [vmem:[%s1 + $0x4] sm:$0xf]
    %v37 = vld [vmem:[%s1 + $0x8] sm:$0xf]
    %v38 = vld [vmem:[%s1 + $0xc] sm:$0xf]
    %v39 = vld [vmem:[%s2] sm:$0x1]
    %v41 = vlaneseq
    %v42 = vshrl.u32 %v41, 7
    %v43 = vsub.s32 0, %v42
    %v44 = vrot.slane %v39, %v43
    %v50 = vunpack.c.l.b16 %v35
    %v51 = vunpack.c.l.b16 %v36
    %v52 = vunpack.c.l.b16 %v37
    %v53 = vunpack.c.l.b16 %v38
    %v54 = vpack.c.b16 %v51, %v50
    %v55 = vpack.c.b16 %v53, %v52
    %vm58 = vcmask 261120
    %v60 = vsel %vm58, %v34, 0
    %62 = vmatprep.subr.bf16.mxu0 0
    %63 = vmatpush1.bf16.msra.mxu0 %v54
    %64 = vmatprep.subr.bf16.mxu0 0
    %65 = vmatpush1.bf16.msra.mxu0 %v55
    %66 = vmatprep.subr.bf16.mxu0 0
    %67 = vmatpush1.bf16.msra.mxu0 0
    %68 = vmatprep.subr.bf16.mxu0 0
    %69 = vmatpush1.bf16.msra.mxu0 0
    %70 = vmatprep.subr.bf16.mxu0 0
    %71 = vmatpush1.bf16.msra.mxu0 0
    %72 = vmatprep.subr.bf16.mxu0 0
    %73 = vmatpush1.bf16.msra.mxu0 0
    %74 = vmatprep.subr.bf16.mxu0 0
    %75 = vmatpush1.bf16.msra.mxu0 0
    %76 = vmatprep.subr.bf16.mxu0 0
    %77 = vmatpush1.bf16.msra.mxu0 0
    %78 = vmatprep.subr.bf16.mxu0 0
    %79 = vmatpush1.bf16.msra.mxu0 0
    %80 = vmatprep.subr.bf16.mxu0 0
    %81 = vmatpush1.bf16.msra.mxu0 0
    %82 = vmatprep.subr.bf16.mxu0 0
    %83 = vmatpush1.bf16.msra.mxu0 0
    %84 = vmatprep.subr.bf16.mxu0 0
    %85 = vmatpush1.bf16.msra.mxu0 0
    %86 = vmatprep.subr.bf16.mxu0 0
    %87 = vmatpush1.bf16.msra.mxu0 0
    %88 = vmatprep.subr.bf16.mxu0 0
    %89 = vmatpush1.bf16.msra.mxu0 0
    %90 = vmatprep.subr.bf16.mxu0 0
    %91 = vmatpush1.bf16.msra.mxu0 0
    %92 = vmatprep.subr.bf16.mxu0 0
    %93 = vmatpush1.bf16.msra.mxu0 0
    %94 = vmatprep.mubr.bf16.mxu0 0
    %95 = vmatmul.mubr.bf16.gmra.mrb[0].mxu0 %v60
    %v96 = vpop.f32.mrb[0].mxu0
    %v97 = vadd.f32 %v44, %v96
    %v98 = vpop.f32.mrb[0].mxu0
    %v99 = vpop.f32.mrb[0].mxu0
    %v100 = vpop.f32.mrb[0].mxu0
    %101 = vdwg.mxu0
    %vm102 = vcmp.ge.f32.partialorder %v97, 0.0
    %v103 = vmul.f32 %v97, 0.2
    %v104 = vsel %vm102, %v97, %v103
    %v105 = vpack.c.bf16 %v104, %v104
    %v106 = vld [vmem:[%s3] sm:$0xf]
    %v107 = vld [vmem:[%s3 + $0x4] sm:$0xf]
    %v108 = vld [vmem:[%s3 + $0x8] sm:$0xf]
    %v109 = vld [vmem:[%s3 + $0xc] sm:$0xf]
    %v110 = vld [vmem:[%s3 + $0x10] sm:$0xf]
    %v111 = vld [vmem:[%s3 + $0x14] sm:$0xf]
    %v112 = vld [vmem:[%s3 + $0x18] sm:$0xf]
    %v113 = vld [vmem:[%s3 + $0x1c] sm:$0xf]
    %v114 = vld [vmem:[%s3 + $0x20] sm:$0xf]
    %v115 = vld [vmem:[%s3 + $0x24] sm:$0xf]
    %v116 = vld [vmem:[%s3 + $0x28] sm:$0xf]
    %v117 = vld [vmem:[%s3 + $0x2c] sm:$0xf]
    %v118 = vld [vmem:[%s3 + $0x30] sm:$0xf]
    %v119 = vld [vmem:[%s3 + $0x34] sm:$0xf]
    %v120 = vld [vmem:[%s3 + $0x38] sm:$0xf]
    %v121 = vld [vmem:[%s3 + $0x3c] sm:$0xf]
    %v122 = vld [vmem:[%s4] sm:$0x1]
    %v124 = vlaneseq
    %v125 = vshrl.u32 %v124, 7
    %v126 = vsub.s32 0, %v125
    %v127 = vrot.slane %v122, %v126
    %v145 = vunpack.c.l.b16 %v106
    %v146 = vunpack.c.l.b16 %v107
    %v147 = vunpack.c.l.b16 %v108
    %v148 = vunpack.c.l.b16 %v109
    %v149 = vunpack.c.l.b16 %v110
    %v150 = vunpack.c.l.b16 %v111
    %v151 = vunpack.c.l.b16 %v112
    %v152 = vunpack.c.l.b16 %v113
    %v153 = vunpack.c.l.b16 %v114
    %v154 = vunpack.c.l.b16 %v115
    %v155 = vunpack.c.l.b16 %v116
    %v156 = vunpack.c.l.b16 %v117
    %v157 = vunpack.c.l.b16 %v118
    %v158 = vunpack.c.l.b16 %v119
    %v159 = vunpack.c.l.b16 %v120
    %v160 = vunpack.c.l.b16 %v121
    %v161 = vpack.c.b16 %v146, %v145
    %v162 = vpack.c.b16 %v148, %v147
    %v163 = vpack.c.b16 %v150, %v149
    %v164 = vpack.c.b16 %v152, %v151
    %v165 = vpack.c.b16 %v154, %v153
    %v166 = vpack.c.b16 %v156, %v155
    %v167 = vpack.c.b16 %v158, %v157
    %v168 = vpack.c.b16 %v160, %v159
    %177 = vmatprep.subr.bf16.mxu0 0
    %178 = vmatpush1.bf16.msra.mxu0 %v161
    %179 = vmatprep.subr.bf16.mxu0 0
    %180 = vmatpush1.bf16.msra.mxu0 %v162
    %181 = vmatprep.subr.bf16.mxu0 0
    %182 = vmatpush1.bf16.msra.mxu0 %v163
    %183 = vmatprep.subr.bf16.mxu0 0
    %184 = vmatpush1.bf16.msra.mxu0 %v164
    %185 = vmatprep.subr.bf16.mxu0 0
    %186 = vmatpush1.bf16.msra.mxu0 %v165
    %187 = vmatprep.subr.bf16.mxu0 0
    %188 = vmatpush1.bf16.msra.mxu0 %v166
    %189 = vmatprep.subr.bf16.mxu0 0
    %190 = vmatpush1.bf16.msra.mxu0 %v167
    %191 = vmatprep.subr.bf16.mxu0 0
    %192 = vmatpush1.bf16.msra.mxu0 %v168
    %193 = vmatprep.subr.bf16.mxu0 0
    %194 = vmatpush1.bf16.msra.mxu0 0
    %195 = vmatprep.subr.bf16.mxu0 0
    %196 = vmatpush1.bf16.msra.mxu0 0
    %197 = vmatprep.subr.bf16.mxu0 0
    %198 = vmatpush1.bf16.msra.mxu0 0
    %199 = vmatprep.subr.bf16.mxu0 0
    %200 = vmatpush1.bf16.msra.mxu0 0
    %201 = vmatprep.subr.bf16.mxu0 0
    %202 = vmatpush1.bf16.msra.mxu0 0
    %203 = vmatprep.subr.bf16.mxu0 0
    %204 = vmatpush1.bf16.msra.mxu0 0
    %205 = vmatprep.subr.bf16.mxu0 0
    %206 = vmatpush1.bf16.msra.mxu0 0
    %207 = vmatprep.subr.bf16.mxu0 0
    %208 = vmatpush1.bf16.msra.mxu0 0
    %209 = vmatprep.mubr.bf16.mxu0 0
    %210 = vmatmul.mubr.bf16.gmra.mrb[0].mxu0 %v105
    %v211 = vpop.f32.mrb[0].mxu0
    %v212 = vadd.f32 %v127, %v211
    %v213 = vpop.f32.mrb[0].mxu0
    %v214 = vpop.f32.mrb[0].mxu0
    %v215 = vpop.f32.mrb[0].mxu0
    %216 = vdwg.mxu0
    %v217 = vtanh.pop %v212
    %v218 = vpack.c.bf16 %v217, %v217
    %v219 = vld [vmem:[%s5] sm:$0xf]
    %v220 = vld [vmem:[%s5 + $0x4] sm:$0xf]
    %v221 = vld [vmem:[%s5 + $0x8] sm:$0xf]
    %v222 = vld [vmem:[%s5 + $0xc] sm:$0xf]
    %v223 = vld [vmem:[%s5 + $0x10] sm:$0xf]
    %v224 = vld [vmem:[%s5 + $0x14] sm:$0xf]
    %v225 = vld [vmem:[%s5 + $0x18] sm:$0xf]
    %v226 = vld [vmem:[%s5 + $0x1c] sm:$0xf]
    %v227 = vld [vmem:[%s5 + $0x20] sm:$0xf]
    %v228 = vld [vmem:[%s5 + $0x24] sm:$0xf]
    %v229 = vld [vmem:[%s5 + $0x28] sm:$0xf]
    %v230 = vld [vmem:[%s5 + $0x2c] sm:$0xf]
    %v231 = vld [vmem:[%s5 + $0x30] sm:$0xf]
    %v232 = vld [vmem:[%s5 + $0x34] sm:$0xf]
    %v233 = vld [vmem:[%s5 + $0x38] sm:$0xf]
    %v234 = vld [vmem:[%s5 + $0x3c] sm:$0xf]
    %v235 = vld [vmem:[%s6] sm:$0x1]
    %v237 = vlaneseq
    %v238 = vshrl.u32 %v237, 7
    %v239 = vsub.s32 0, %v238
    %v240 = vrot.slane %v235, %v239
    %v258 = vunpack.c.l.b16 %v219
    %v259 = vunpack.c.l.b16 %v220
    %v260 = vunpack.c.l.b16 %v221
    %v261 = vunpack.c.l.b16 %v222
    %v262 = vunpack.c.l.b16 %v223
    %v263 = vunpack.c.l.b16 %v224
    %v264 = vunpack.c.l.b16 %v225
    %v265 = vunpack.c.l.b16 %v226
    %v266 = vunpack.c.l.b16 %v227
    %v267 = vunpack.c.l.b16 %v228
    %v268 = vunpack.c.l.b16 %v229
    %v269 = vunpack.c.l.b16 %v230
    %v270 = vunpack.c.l.b16 %v231
    %v271 = vunpack.c.l.b16 %v232
    %v272 = vunpack.c.l.b16 %v233
    %v273 = vunpack.c.l.b16 %v234
    %v274 = vpack.c.b16 %v259, %v258
    %v275 = vpack.c.b16 %v261, %v260
    %v276 = vpack.c.b16 %v263, %v262
    %v277 = vpack.c.b16 %v265, %v264
    %v278 = vpack.c.b16 %v267, %v266
    %v279 = vpack.c.b16 %v269, %v268
    %v280 = vpack.c.b16 %v271, %v270
    %v281 = vpack.c.b16 %v273, %v272
    %290 = vmatprep.subr.bf16.mxu0 0
    %291 = vmatpush1.bf16.msra.mxu0 %v274
    %292 = vmatprep.subr.bf16.mxu0 0
    %293 = vmatpush1.bf16.msra.mxu0 %v275
    %294 = vmatprep.subr.bf16.mxu0 0
    %295 = vmatpush1.bf16.msra.mxu0 %v276
    %296 = vmatprep.subr.bf16.mxu0 0
    %297 = vmatpush1.bf16.msra.mxu0 %v277
    %298 = vmatprep.subr.bf16.mxu0 0
    %299 = vmatpush1.bf16.msra.mxu0 %v278
    %300 = vmatprep.subr.bf16.mxu0 0
    %301 = vmatpush1.bf16.msra.mxu0 %v279
    %302 = vmatprep.subr.bf16.mxu0 0
    %303 = vmatpush1.bf16.msra.mxu0 %v280
    %304 = vmatprep.subr.bf16.mxu0 0
    %305 = vmatpush1.bf16.msra.mxu0 %v281
    %306 = vmatprep.subr.bf16.mxu0 0
    %307 = vmatpush1.bf16.msra.mxu0 0
    %308 = vmatprep.subr.bf16.mxu0 0
    %309 = vmatpush1.bf16.msra.mxu0 0
    %310 = vmatprep.subr.bf16.mxu0 0
    %311 = vmatpush1.bf16.msra.mxu0 0
    %312 = vmatprep.subr.bf16.mxu0 0
    %313 = vmatpush1.bf16.msra.mxu0 0
    %314 = vmatprep.subr.bf16.mxu0 0
    %315 = vmatpush1.bf16.msra.mxu0 0
    %316 = vmatprep.subr.bf16.mxu0 0
    %317 = vmatpush1.bf16.msra.mxu0 0
    %318 = vmatprep.subr.bf16.mxu0 0
    %319 = vmatpush1.bf16.msra.mxu0 0
    %320 = vmatprep.subr.bf16.mxu0 0
    %321 = vmatpush1.bf16.msra.mxu0 0
    %322 = vmatprep.mubr.bf16.mxu0 0
    %323 = vmatmul.mubr.bf16.gmra.mrb[0].mxu0 %v218
    %v324 = vpop.f32.mrb[0].mxu0
    %v325 = vadd.f32 %v240, %v324
    %v326 = vpop.f32.mrb[0].mxu0
    %v327 = vpop.f32.mrb[0].mxu0
    %v328 = vpop.f32.mrb[0].mxu0
    %329 = vdwg.mxu0
    %v330 = vtanh.pop %v325
    %v331 = vpack.c.bf16 %v330, %v330
    %v332 = vld [vmem:[%s7] sm:$0xf]
    %v333 = vld [vmem:[%s7 + $0x4] sm:$0xf]
    %v334 = vld [vmem:[%s7 + $0x8] sm:$0xf]
    %v335 = vld [vmem:[%s7 + $0xc] sm:$0xf]
    %v336 = vld [vmem:[%s7 + $0x10] sm:$0xf]
    %v337 = vld [vmem:[%s7 + $0x14] sm:$0xf]
    %v338 = vld [vmem:[%s7 + $0x18] sm:$0xf]
    %v339 = vld [vmem:[%s7 + $0x1c] sm:$0xf]
    %v340 = vld [vmem:[%s8] sm:$0x1]
    %v342 = vlaneseq
    %v343 = vshrl.u32 %v342, 7
    %v344 = vsub.s32 0, %v343
    %v345 = vrot.slane %v340, %v344
    %v355 = vunpack.c.l.b16 %v332
    %v356 = vunpack.c.l.b16 %v333
    %v357 = vunpack.c.l.b16 %v334
    %v358 = vunpack.c.l.b16 %v335
    %v359 = vunpack.c.l.b16 %v336
    %v360 = vunpack.c.l.b16 %v337
    %v361 = vunpack.c.l.b16 %v338
    %v362 = vunpack.c.l.b16 %v339
    %v363 = vpack.c.b16 %v356, %v355
    %v364 = vpack.c.b16 %v358, %v357
    %v365 = vpack.c.b16 %v360, %v359
    %v366 = vpack.c.b16 %v362, %v361
    %vm371 = vcmask 523264
    %v373 = vsel %vm371, %v331, 0
    %375 = vmatprep.subr.bf16.mxu0 0
    %376 = vmatpush1.bf16.msra.mxu0 %v363
    %377 = vmatprep.subr.bf16.mxu0 0
    %378 = vmatpush1.bf16.msra.mxu0 %v364
    %379 = vmatprep.subr.bf16.mxu0 0
    %380 = vmatpush1.bf16.msra.mxu0 %v365
    %381 = vmatprep.subr.bf16.mxu0 0
    %382 = vmatpush1.bf16.msra.mxu0 %v366
    %383 = vmatprep.subr.bf16.mxu0 0
    %384 = vmatpush1.bf16.msra.mxu0 0
    %385 = vmatprep.subr.bf16.mxu0 0
    %386 = vmatpush1.bf16.msra.mxu0 0
    %387 = vmatprep.subr.bf16.mxu0 0
    %388 = vmatpush1.bf16.msra.mxu0 0
    %389 = vmatprep.subr.bf16.mxu0 0
    %390 = vmatpush1.bf16.msra.mxu0 0
    %391 = vmatprep.subr.bf16.mxu0 0
    %392 = vmatpush1.bf16.msra.mxu0 0
    %393 = vmatprep.subr.bf16.mxu0 0
    %394 = vmatpush1.bf16.msra.mxu0 0
    %395 = vmatprep.subr.bf16.mxu0 0
    %396 = vmatpush1.bf16.msra.mxu0 0
    %397 = vmatprep.subr.bf16.mxu0 0
    %398 = vmatpush1.bf16.msra.mxu0 0
    %399 = vmatprep.subr.bf16.mxu0 0
    %400 = vmatpush1.bf16.msra.mxu0 0
    %401 = vmatprep.subr.bf16.mxu0 0
    %402 = vmatpush1.bf16.msra.mxu0 0
    %403 = vmatprep.subr.bf16.mxu0 0
    %404 = vmatpush1.bf16.msra.mxu0 0
    %405 = vmatprep.subr.bf16.mxu0 0
    %406 = vmatpush1.bf16.msra.mxu0 0
    %407 = vmatprep.mubr.bf16.mxu0 0
    %408 = vmatmul.mubr.bf16.gmra.mrb[0].mxu0 %v373
    %v409 = vpop.f32.mrb[0].mxu0
    %v410 = vadd.f32 %v345, %v409
    %v411 = vpop.f32.mrb[0].mxu0
    %v412 = vpop.f32.mrb[0].mxu0
    %v413 = vpop.f32.mrb[0].mxu0
    %414 = vdwg.mxu0
    %v415 = vxor.u32 %v410, 2147483648
    %v416 = vmul.f32 %v415, 1.442695
    %v417 = vpow.pop %v416
    %v418 = vadd.f32 %v417, 1.0
    %v419 = vrcp.pop %v418
    %v420 = vmul.f32 1.0, %v419
    %vm421 = vcmask 64512
    %422 = vst.msk [vmem:[#allocation2] sm:$0xff] %vm421, %v420
    // Predicated region
    $region38: #{tpu_custom_call.1} parent=1 // pred_check
      _
    $region39: #{tpu_custom_call.1} parent=1 // pred_check_branch
      %424 = sbr.rel (0) target = $region41
    $region40: #{tpu_custom_call.1} parent=1 // pred_region
      %s426 = ssub.s32 128, 128
      %427 = vsyncadd [#allocation3], %s426
      %s429 = sshll.u32 [#allocation2], 4
      %s430 = int_to_ptr.vmem [resolvable:$true] %s429
      %432 = dma.vmem_to_hbm [thread:$0]  %s430, 128, %s9, [#allocation3]
    $region41: #{tpu_custom_call.1} parent=1 // pred_fallthru
      _
    // Predicated region
    $region42: #{tpu_custom_call.1} parent=1 // pred_check
      _
    $region43: #{tpu_custom_call.1} parent=1 // pred_check_branch
      %434 = sbr.rel (0) target = $region45
    $region44: #{tpu_custom_call.1} parent=1 // pred_region
      %435 = dma.done [#allocation3], 128
    $region45: #{tpu_custom_call.1} parent=1 // pred_fallthru
      _
    %436 = vsyncpa [#allocation3], 1

</llo_original>
